<compile_context>
chip_gen: v7x
topology: tpu7x:2x2x1
jax: 0.10.0
libtpu: 0.0.40
codegen_flags: <defaults>
</compile_context>

<pallas_src>
import functools

import jax
import jax.numpy as jnp
from jax import lax
from jax.experimental import pallas as pl
from jax.experimental.pallas import tpu as pltpu


def _gp_kernel(x_ref, w_ref, b_ref, cos_ref, sinn_ref, sinp_ref,
               padm_ref, pada_ref, tril_ref, o_ref, *, ent_type_size, inner_dim):
    # x_ref:    (1, S, H)    bf16  hidden states for batch b
    # w_ref:    (H, E*2D)    bf16  fused q/k projection, rotate-half column
    #                              layout, 1/sqrt(D) folded into q columns
    # b_ref:    (1, E*2D)    f32   fused bias (same layout / scaling)
    # cos_ref:  (S, E*2D)    f32   cos table tiled across all q/k chunks
    # sinn_ref: (S, E*2D)    f32   -sin at first-half columns, 0 elsewhere
    # sinp_ref: (S, E*2D)    f32   +sin at second-half columns, 0 elsewhere
    # padm_ref: (1, 1, S)    f32   multiplicative key-padding mask
    # pada_ref: (1, 1, S)    f32   additive key-padding penalty
    # tril_ref: (S, S)       f32   additive strict-lower-triangular penalty
    # o_ref:    (1, E, S, S) f32   logits
    E = ent_type_size
    D = inner_dim
    half = D // 2
    S = x_ref.shape[1]
    E2D = w_ref.shape[1]

    x = x_ref[0]                                                   # (S, H) bf16
    qk = jnp.dot(x, w_ref[...], preferred_element_type=jnp.float32)
    qk = qk + b_ref[...]                                           # (S, E2D) f32

    # Rotate-half RoPE for every q/k chunk at once.  Column layout (set up in
    # the wrapper) puts each feature's rotation partner exactly +-half columns
    # away inside its own D-wide chunk; the zero-padded signed-sin tables kill
    # the cross-chunk wraparound terms of the cyclic rolls.
    qk = (qk * cos_ref[...]
          + pltpu.roll(qk, E2D - half, axis=1) * sinn_ref[...]
          + pltpu.roll(qk, half, axis=1) * sinp_ref[...])

    qk = qk.astype(jnp.bfloat16)                                   # bf16 for MXU

    pad_mul = jnp.broadcast_to(padm_ref[0], (S, S))                # hoisted broadcast
    add_mask = pada_ref[0] + tril_ref[...]                         # (S, S)

    for e in range(E):                                             # static unroll
        q = qk[:, e * 2 * D:e * 2 * D + D]                         # (S, D)
        k = qk[:, e * 2 * D + D:(e + 1) * 2 * D]                   # (S, D)
        logits = lax.dot_general(q, k, (((1,), (1,)), ((), ())),
                                 preferred_element_type=jnp.float32)  # q @ k^T
        o_ref[0, e] = logits * pad_mul + add_mask


@functools.partial(jax.jit, static_argnames=("ent_type_size", "inner_dim"))
def raw_global_pointer(last_hidden_state, attention_mask, weight, bias,
                       *, ent_type_size, inner_dim):
    """last_hidden_state: [B, S, H] f32; attention_mask: [B, S] f32;
    weight: [E*2D, H] (PyTorch Linear layout); bias: [E*2D]."""
    B, S, H = last_hidden_state.shape
    E, D = ent_type_size, inner_dim
    E2D = E * 2 * D
    half = D // 2
    inv_sqrt_d = 1.0 / float(D) ** 0.5
    pen = jnp.float32(1e12 * inv_sqrt_d)          # 1e12 with 1/sqrt(D) folded in

    # ---- glue: fused projection weight in rotate-half column layout ----
    W = weight.astype(jnp.float32).T                             # [H, E2D]
    bvec = bias.astype(jnp.float32)                              # [E2D]
    # de-interleave each D-chunk: [f0, f2, ..., f_{D-2}, f1, f3, ..., f_{D-1}]
    perm_within = jnp.concatenate([jnp.arange(0, D, 2), jnp.arange(1, D, 2)])
    perm = (jnp.arange(2 * E)[:, None] * D + perm_within[None, :]).reshape(-1)
    W = W[:, perm]
    bvec = bvec[perm]
    # fold 1/sqrt(D) into the q chunks (even D-chunks)
    col = jnp.arange(E2D)
    colscale = jnp.where((col // D) % 2 == 0, inv_sqrt_d, 1.0).astype(jnp.float32)
    W = (W * colscale[None, :]).astype(jnp.bfloat16)
    bvec = (bvec * colscale).reshape(1, E2D)

    # ---- glue: RoPE tables (rotate-half layout, sign folded into sin) ----
    pos = jnp.arange(S, dtype=jnp.float32)[:, None]              # (S, 1)
    idx = jnp.arange(half, dtype=jnp.float32)
    theta = jnp.power(10000.0, -2.0 * idx / D)                   # (half,)
    ang = pos * theta                                            # (S, half)
    cos_h, sin_h = jnp.cos(ang), jnp.sin(ang)
    zeros_h = jnp.zeros_like(sin_h)
    cos_all = jnp.tile(cos_h, (1, 4 * E))                                  # (S, E2D)
    sin_neg = jnp.tile(jnp.concatenate([-sin_h, zeros_h], axis=1), (1, 2 * E))
    sin_pos = jnp.tile(jnp.concatenate([zeros_h, sin_h], axis=1), (1, 2 * E))

    # ---- glue: precomputed masks (penalties already divided by sqrt(D)) ----
    padm = attention_mask.astype(jnp.float32).reshape(B, 1, S)
    pada = -(1.0 - padm) * pen
    r = jnp.arange(S)[:, None]
    c = jnp.arange(S)[None, :]
    tril_add = jnp.where(r > c, -pen, jnp.float32(0.0)).astype(jnp.float32)

    x_bf = last_hidden_state.astype(jnp.bfloat16)

    cost = pl.CostEstimate(
        flops=2 * B * S * H * E2D + 2 * B * E * S * S * D,
        transcendentals=0,
        bytes_accessed=(B * S * H * 2 + H * E2D * 2 + E2D * 4
                        + 3 * S * E2D * 4 + 2 * B * S * 4 + S * S * 4
                        + B * E * S * S * 4))

    kernel = functools.partial(_gp_kernel, ent_type_size=E, inner_dim=D)
    out = pl.pallas_call(
        kernel,
        out_shape=jax.ShapeDtypeStruct((B, E, S, S), jnp.float32),
        grid_spec=pltpu.PrefetchScalarGridSpec(
            num_scalar_prefetch=0,
            grid=(B,),
            in_specs=[
                pl.BlockSpec((1, S, H), lambda b: (b, 0, 0)),      # x
                pl.BlockSpec((H, E2D), lambda b: (0, 0)),          # W_all (resident)
                pl.BlockSpec((1, E2D), lambda b: (0, 0)),          # bias  (resident)
                pl.BlockSpec((S, E2D), lambda b: (0, 0)),          # cos   (resident)
                pl.BlockSpec((S, E2D), lambda b: (0, 0)),          # -sin  (resident)
                pl.BlockSpec((S, E2D), lambda b: (0, 0)),          # +sin  (resident)
                pl.BlockSpec((1, 1, S), lambda b: (b, 0, 0)),      # pad (mul)
                pl.BlockSpec((1, 1, S), lambda b: (b, 0, 0)),      # pad (add)
                pl.BlockSpec((S, S), lambda b: (0, 0)),            # tril penalty
            ],
            out_specs=pl.BlockSpec((1, E, S, S), lambda b: (b, 0, 0, 0)),
        ),
        compiler_params=pltpu.CompilerParams(
            dimension_semantics=("parallel",)),
        cost_estimate=cost,
    )(x_bf, W, bvec, cos_all, sin_neg, sin_pos, padm, pada, tril_add)
    return out


def _reference(last_hidden_state, attention_mask, weight, bias, E, D):
    """Pure-JAX mirror of the PyTorch forward, for verification."""
    B, S, H = last_hidden_state.shape
    out = last_hidden_state @ weight.T + bias                     # [B,S,E*2D]
    out = out.reshape(B, S, E, 2 * D)
    qw, kw = out[..., :D], out[..., D:]
    pos = jnp.arange(S, dtype=jnp.float32)[:, None]
    idx = jnp.arange(D // 2, dtype=jnp.float32)
    theta = jnp.power(10000.0, -2.0 * idx / D)
    ang = pos * theta
    emb = jnp.stack([jnp.sin(ang), jnp.cos(ang)], -1).reshape(S, D)
    cos_pos = jnp.repeat(emb[:, None, 1::2], 2, axis=-1)          # (S,1,D)
    sin_pos = jnp.repeat(emb[:, None, ::2], 2, axis=-1)

    def rot(v):
        v2 = jnp.stack([-v[..., 1::2], v[..., ::2]], -1).reshape(v.shape)
        return v * cos_pos + v2 * sin_pos

    qw, kw = rot(qw), rot(kw)
    logits = jnp.einsum('bmhd,bnhd->bhmn', qw, kw)
    pad = attention_mask[:, None, None, :]
    logits = logits * pad - (1.0 - pad) * 1e12
    tril = jnp.tril(jnp.ones((S, S), jnp.float32), -1)
    logits = logits - tril * 1e12
    return logits / (D ** 0.5)


if __name__ == "__main__":
    B, S, H = 2, 8, 32
    E, D = 3, 16   # ent_type_size, inner_dim

    key = jax.random.PRNGKey(0)
    k_x, k_w, k_b = jax.random.split(key, 3)

    x = jax.random.normal(k_x, (B, S, H), dtype=jnp.float32)
    # Deterministic Linear(H, E*2D) parameters (PyTorch layout: [out, in]).
    weight = jax.random.normal(k_w, (E * 2 * D, H), dtype=jnp.float32) * 0.05
    bias = jax.random.normal(k_b, (E * 2 * D,), dtype=jnp.float32) * 0.05
    # Padding mask: batch 0 has 6 valid tokens, batch 1 has 8.
    lens = jnp.array([6, 8])
    attention_mask = (jnp.arange(S)[None, :] < lens[:, None]).astype(jnp.float32)

    out = raw_global_pointer(x, attention_mask, weight, bias,
                             ent_type_size=E, inner_dim=D)
    out = jax.block_until_ready(out)

    ref = _reference(x, attention_mask, weight, bias, E, D)
    assert out.shape == (B, E, S, S)
    # bf16 MXU inputs with f32 accumulation -> slightly looser atol.
    assert jnp.allclose(out, ref, rtol=1e-3, atol=2e-2), "mismatch vs reference"

    print("KERNEL_OK")
</pallas_src>

<mosaic_0001>
module attributes {stable_mosaic.version = 11 : i64} {
  func.func @_gp_kernel(%arg0: i32, %arg1: memref<1x8x32xbf16, #tpu.memory_space<vmem>>, %arg2: memref<32x96xbf16, #tpu.memory_space<vmem>>, %arg3: memref<1x96xf32, #tpu.memory_space<vmem>>, %arg4: memref<8x96xf32, #tpu.memory_space<vmem>>, %arg5: memref<8x96xf32, #tpu.memory_space<vmem>>, %arg6: memref<8x96xf32, #tpu.memory_space<vmem>>, %arg7: memref<1x1x8xf32, #tpu.memory_space<vmem>>, %arg8: memref<1x1x8xf32, #tpu.memory_space<vmem>>, %arg9: memref<8x8xf32, #tpu.memory_space<vmem>>, %arg10: memref<1x3x8x8xf32, #tpu.memory_space<vmem>>) attributes {dimension_semantics = [#tpu.dimension_semantics<parallel>], iteration_bounds = array<i64: 2>, scalar_prefetch = 0 : i64, scratch_operands = 0 : i64, tpu.core_type = #tpu.core_type<tc>, window_params = [{transform_indices = @transform_0, window_bounds = array<i64: 1, 8, 32>}, {pipeline_mode = #tpu.pipeline_mode<synchronous>, transform_indices = @transform_1, window_bounds = array<i64: 32, 96>}, {pipeline_mode = #tpu.pipeline_mode<synchronous>, transform_indices = @transform_2, window_bounds = array<i64: 1, 96>}, {pipeline_mode = #tpu.pipeline_mode<synchronous>, transform_indices = @transform_3, window_bounds = array<i64: 8, 96>}, {pipeline_mode = #tpu.pipeline_mode<synchronous>, transform_indices = @transform_4, window_bounds = array<i64: 8, 96>}, {pipeline_mode = #tpu.pipeline_mode<synchronous>, transform_indices = @transform_5, window_bounds = array<i64: 8, 96>}, {transform_indices = @transform_6, window_bounds = array<i64: 1, 1, 8>}, {transform_indices = @transform_7, window_bounds = array<i64: 1, 1, 8>}, {pipeline_mode = #tpu.pipeline_mode<synchronous>, transform_indices = @transform_8, window_bounds = array<i64: 8, 8>}, {transform_indices = @transform_9, window_bounds = array<i64: 1, 3, 8, 8>}]} {
    %c0 = arith.constant 0 : index
    %c0_0 = arith.constant 0 : index
    %c0_1 = arith.constant 0 : index
    %0 = vector.load %arg1[%c0, %c0_0, %c0_1] : memref<1x8x32xbf16, #tpu.memory_space<vmem>>, vector<1x8x32xbf16>
    %1 = vector.shape_cast %0 : vector<1x8x32xbf16> to vector<8x32xbf16>
    %c0_2 = arith.constant 0 : index
    %c0_3 = arith.constant 0 : index
    %2 = vector.load %arg2[%c0_2, %c0_3] : memref<32x96xbf16, #tpu.memory_space<vmem>>, vector<32x96xbf16>
    %cst = arith.constant dense<0.000000e+00> : vector<8x96xf32>
    %3 = tpu.matmul %1, %2, %cst {dimension_numbers = #tpu.dot_dimension_numbers<[1], [0], [0], [1], [0, 0, 1, 1], [], []>} : vector<8x32xbf16>, vector<32x96xbf16>, vector<8x96xf32> -> vector<8x96xf32>
    %c0_4 = arith.constant 0 : index
    %c0_5 = arith.constant 0 : index
    %4 = vector.load %arg3[%c0_4, %c0_5] : memref<1x96xf32, #tpu.memory_space<vmem>>, vector<1x96xf32>
    %5 = vector.broadcast %4 : vector<1x96xf32> to vector<8x96xf32>
    %6 = arith.addf %3, %5 : vector<8x96xf32>
    %c0_6 = arith.constant 0 : index
    %c0_7 = arith.constant 0 : index
    %7 = vector.load %arg4[%c0_6, %c0_7] : memref<8x96xf32, #tpu.memory_space<vmem>>, vector<8x96xf32>
    %8 = arith.mulf %6, %7 : vector<8x96xf32>
    %c88_i32 = arith.constant 88 : i32
    %9 = tpu.dynamic_rotate %6 by %c88_i32 dim 1 : vector<8x96xf32>, i32 -> vector<8x96xf32>
    %c0_8 = arith.constant 0 : index
    %c0_9 = arith.constant 0 : index
    %10 = vector.load %arg5[%c0_8, %c0_9] : memref<8x96xf32, #tpu.memory_space<vmem>>, vector<8x96xf32>
    %11 = arith.mulf %9, %10 : vector<8x96xf32>
    %12 = arith.addf %8, %11 : vector<8x96xf32>
    %c8_i32 = arith.constant 8 : i32
    %13 = tpu.dynamic_rotate %6 by %c8_i32 dim 1 : vector<8x96xf32>, i32 -> vector<8x96xf32>
    %c0_10 = arith.constant 0 : index
    %c0_11 = arith.constant 0 : index
    %14 = vector.load %arg6[%c0_10, %c0_11] : memref<8x96xf32, #tpu.memory_space<vmem>>, vector<8x96xf32>
    %15 = arith.mulf %13, %14 : vector<8x96xf32>
    %16 = arith.addf %12, %15 : vector<8x96xf32>
    %17 = arith.truncf %16 : vector<8x96xf32> to vector<8x96xbf16>
    %c0_12 = arith.constant 0 : index
    %c0_13 = arith.constant 0 : index
    %c0_14 = arith.constant 0 : index
    %18 = vector.load %arg7[%c0_12, %c0_13, %c0_14] : memref<1x1x8xf32, #tpu.memory_space<vmem>>, vector<1x1x8xf32>
    %19 = vector.shape_cast %18 : vector<1x1x8xf32> to vector<1x8xf32>
    %20 = vector.shape_cast %19 : vector<1x8xf32> to vector<1x8xf32>
    %21 = vector.broadcast %20 : vector<1x8xf32> to vector<8x8xf32>
    %c0_15 = arith.constant 0 : index
    %c0_16 = arith.constant 0 : index
    %c0_17 = arith.constant 0 : index
    %22 = vector.load %arg8[%c0_15, %c0_16, %c0_17] : memref<1x1x8xf32, #tpu.memory_space<vmem>>, vector<1x1x8xf32>
    %23 = vector.shape_cast %22 : vector<1x1x8xf32> to vector<1x8xf32>
    %c0_18 = arith.constant 0 : index
    %c0_19 = arith.constant 0 : index
    %24 = vector.load %arg9[%c0_18, %c0_19] : memref<8x8xf32, #tpu.memory_space<vmem>>, vector<8x8xf32>
    %25 = vector.broadcast %23 : vector<1x8xf32> to vector<8x8xf32>
    %26 = arith.addf %25, %24 : vector<8x8xf32>
    %27 = vector.extract_strided_slice %17 {offsets = [0, 0], sizes = [8, 16], strides = [1, 1]} : vector<8x96xbf16> to vector<8x16xbf16>
    %28 = vector.extract_strided_slice %17 {offsets = [0, 16], sizes = [8, 16], strides = [1, 1]} : vector<8x96xbf16> to vector<8x16xbf16>
    %cst_20 = arith.constant dense<0.000000e+00> : vector<8x8xf32>
    %29 = tpu.matmul %27, %28, %cst_20 {dimension_numbers = #tpu.dot_dimension_numbers<[1], [1], [0], [0], [0, 0, 1, 0], [], []>} : vector<8x16xbf16>, vector<8x16xbf16>, vector<8x8xf32> -> vector<8x8xf32>
    %30 = arith.mulf %29, %21 : vector<8x8xf32>
    %31 = arith.addf %30, %26 : vector<8x8xf32>
    %c0_21 = arith.constant 0 : index
    %c0_22 = arith.constant 0 : index
    %c0_23 = arith.constant 0 : index
    %c0_24 = arith.constant 0 : index
    %32 = vector.load %arg10[%c0_21, %c0_22, %c0_23, %c0_24] : memref<1x3x8x8xf32, #tpu.memory_space<vmem>>, vector<1x1x8x8xf32>
    %33 = vector.shape_cast %32 : vector<1x1x8x8xf32> to vector<8x8xf32>
    %34 = vector.shape_cast %31 : vector<8x8xf32> to vector<1x1x8x8xf32>
    tpu.vector_store %arg10[%c0_21, %c0_22, %c0_23, %c0_24], %34 {strides = array<i32>} : memref<1x3x8x8xf32, #tpu.memory_space<vmem>>, vector<1x1x8x8xf32>,
    %35 = vector.extract_strided_slice %17 {offsets = [0, 32], sizes = [8, 16], strides = [1, 1]} : vector<8x96xbf16> to vector<8x16xbf16>
    %36 = vector.extract_strided_slice %17 {offsets = [0, 48], sizes = [8, 16], strides = [1, 1]} : vector<8x96xbf16> to vector<8x16xbf16>
    %cst_25 = arith.constant dense<0.000000e+00> : vector<8x8xf32>
    %37 = tpu.matmul %35, %36, %cst_25 {dimension_numbers = #tpu.dot_dimension_numbers<[1], [1], [0], [0], [0, 0, 1, 0], [], []>} : vector<8x16xbf16>, vector<8x16xbf16>, vector<8x8xf32> -> vector<8x8xf32>
    %38 = arith.mulf %37, %21 : vector<8x8xf32>
    %39 = arith.addf %38, %26 : vector<8x8xf32>
    %c0_26 = arith.constant 0 : index
    %c1 = arith.constant 1 : index
    %c0_27 = arith.constant 0 : index
    %c0_28 = arith.constant 0 : index
    %40 = vector.load %arg10[%c0_26, %c1, %c0_27, %c0_28] : memref<1x3x8x8xf32, #tpu.memory_space<vmem>>, vector<1x1x8x8xf32>
    %41 = vector.shape_cast %40 : vector<1x1x8x8xf32> to vector<8x8xf32>
    %42 = vector.shape_cast %39 : vector<8x8xf32> to vector<1x1x8x8xf32>
    tpu.vector_store %arg10[%c0_26, %c1, %c0_27, %c0_28], %42 {strides = array<i32>} : memref<1x3x8x8xf32, #tpu.memory_space<vmem>>, vector<1x1x8x8xf32>,
    %43 = vector.extract_strided_slice %17 {offsets = [0, 64], sizes = [8, 16], strides = [1, 1]} : vector<8x96xbf16> to vector<8x16xbf16>
    %44 = vector.extract_strided_slice %17 {offsets = [0, 80], sizes = [8, 16], strides = [1, 1]} : vector<8x96xbf16> to vector<8x16xbf16>
    %cst_29 = arith.constant dense<0.000000e+00> : vector<8x8xf32>
    %45 = tpu.matmul %43, %44, %cst_29 {dimension_numbers = #tpu.dot_dimension_numbers<[1], [1], [0], [0], [0, 0, 1, 0], [], []>} : vector<8x16xbf16>, vector<8x16xbf16>, vector<8x8xf32> -> vector<8x8xf32>
    %46 = arith.mulf %45, %21 : vector<8x8xf32>
    %47 = arith.addf %46, %26 : vector<8x8xf32>
    %c0_30 = arith.constant 0 : index
    %c2 = arith.constant 2 : index
    %c0_31 = arith.constant 0 : index
    %c0_32 = arith.constant 0 : index
    %48 = vector.load %arg10[%c0_30, %c2, %c0_31, %c0_32] : memref<1x3x8x8xf32, #tpu.memory_space<vmem>>, vector<1x1x8x8xf32>
    %49 = vector.shape_cast %48 : vector<1x1x8x8xf32> to vector<8x8xf32>
    %50 = vector.shape_cast %47 : vector<8x8xf32> to vector<1x1x8x8xf32>
    tpu.vector_store %arg10[%c0_30, %c2, %c0_31, %c0_32], %50 {strides = array<i32>} : memref<1x3x8x8xf32, #tpu.memory_space<vmem>>, vector<1x1x8x8xf32>,
    return
  }
  func.func @transform_0(%arg0: i32) -> (i32, i32, i32) {
    %c0_i32 = arith.constant 0 : i32
    %c0_i32_0 = arith.constant 0 : i32
    %c0_i32_1 = arith.constant 0 : i32
    return %arg0, %c0_i32, %c0_i32_0 : i32, i32, i32
  }
  func.func @transform_1(%arg0: i32) -> (i32, i32) {
    %c0_i32 = arith.constant 0 : i32
    %c0_i32_0 = arith.constant 0 : i32
    %c0_i32_1 = arith.constant 0 : i32
    return %c0_i32, %c0_i32_0 : i32, i32
  }
  func.func @transform_2(%arg0: i32) -> (i32, i32) {
    %c0_i32 = arith.constant 0 : i32
    %c0_i32_0 = arith.constant 0 : i32
    %c0_i32_1 = arith.constant 0 : i32
    return %c0_i32, %c0_i32_0 : i32, i32
  }
  func.func @transform_3(%arg0: i32) -> (i32, i32) {
    %c0_i32 = arith.constant 0 : i32
    %c0_i32_0 = arith.constant 0 : i32
    %c0_i32_1 = arith.constant 0 : i32
    return %c0_i32, %c0_i32_0 : i32, i32
  }
  func.func @transform_4(%arg0: i32) -> (i32, i32) {
    %c0_i32 = arith.constant 0 : i32
    %c0_i32_0 = arith.constant 0 : i32
    %c0_i32_1 = arith.constant 0 : i32
    return %c0_i32, %c0_i32_0 : i32, i32
  }
  func.func @transform_5(%arg0: i32) -> (i32, i32) {
    %c0_i32 = arith.constant 0 : i32
    %c0_i32_0 = arith.constant 0 : i32
    %c0_i32_1 = arith.constant 0 : i32
    return %c0_i32, %c0_i32_0 : i32, i32
  }
  func.func @transform_6(%arg0: i32) -> (i32, i32, i32) {
    %c0_i32 = arith.constant 0 : i32
    %c0_i32_0 = arith.constant 0 : i32
    %c0_i32_1 = arith.constant 0 : i32
    return %arg0, %c0_i32, %c0_i32_0 : i32, i32, i32
  }
  func.func @transform_7(%arg0: i32) -> (i32, i32, i32) {
    %c0_i32 = arith.constant 0 : i32
    %c0_i32_0 = arith.constant 0 : i32
    %c0_i32_1 = arith.constant 0 : i32
    return %arg0, %c0_i32, %c0_i32_0 : i32, i32, i32
  }
  func.func @transform_8(%arg0: i32) -> (i32, i32) {
    %c0_i32 = arith.constant 0 : i32
    %c0_i32_0 = arith.constant 0 : i32
    %c0_i32_1 = arith.constant 0 : i32
    return %c0_i32, %c0_i32_0 : i32, i32
  }
  func.func @transform_9(%arg0: i32) -> (i32, i32, i32, i32) {
    %c0_i32 = arith.constant 0 : i32
    %c0_i32_0 = arith.constant 0 : i32
    %c0_i32_1 = arith.constant 0 : i32
    %c0_i32_2 = arith.constant 0 : i32
    return %arg0, %c0_i32, %c0_i32_0, %c0_i32_1 : i32, i32, i32, i32
  }
}

</mosaic_0001>

<llo_original>
// kernel: tile.19
$region0: #{tile.19}
  %s0 = inlined_call_operand.vmem [shape: f32[8,12,8], index: 0, kind: input, shape index: {}]
  %s1 = inlined_call_operand.vmem [shape: f32[8,96], index: 1, kind: output, shape index: {}]
  %s2 = smov 3
  %v3 = vld [vmem:[%s0] ss:$16 sm:%s2]
  %s4 = smov 12
  %v5 = vld [vmem:[%s0] ss:$16 sm:%s4]
  %vm6 = vcmask 1043458
  %v7 = vsel %vm6, %v5, %v3
  %s8 = smov 48
  %v9 = vld [vmem:[%s0] ss:$16 sm:%s8]
  %vm10 = vcmask 1045508
  %v11 = vsel %vm10, %v9, %v7
  %s12 = smov 192
  %v13 = vld [vmem:[%s0] ss:$16 sm:%s12]
  %vm14 = vcmask 1047558
  %v15 = vsel %vm14, %v13, %v11
  %vm16 = vcmask 64512
  %17 = vst.msk [vmem:[%s1] sm:$0xff] %vm16, %v15
  %s18 = scalar_lea.vmem %s0, 11
  %s19 = smov 3
  %v20 = vld [vmem:[%s18] ss:$16 sm:%s19]
  %s21 = scalar_lea.vmem %s0, 11
  %s22 = smov 12
  %v23 = vld [vmem:[%s21] ss:$16 sm:%s22]
  %vm24 = vcmask 1043458
  %v25 = vsel %vm24, %v23, %v20
  %s26 = scalar_lea.vmem %s0, 11
  %s27 = smov 48
  %v28 = vld [vmem:[%s26] ss:$16 sm:%s27]
  %vm29 = vcmask 1045508
  %v30 = vsel %vm29, %v28, %v25
  %s31 = scalar_lea.vmem %s0, 11
  %s32 = smov 192
  %v33 = vld [vmem:[%s31] ss:$16 sm:%s32]
  %vm34 = vcmask 1047558
  %v35 = vsel %vm34, %v33, %v30
  %36 = vrot.lane.b32.xlu0 %v35, 88
  %v37 = vpop.permute.xlu0 %36
  %vm38 = vcmask 786112
  %39 = vst.msk [vmem:[%s1] sm:$0xff] %vm38, %v37
  %s40 = scalar_lea.vmem %s0, 10
  %s41 = smov 3
  %v42 = vld [vmem:[%s40] ss:$16 sm:%s41]
  %s43 = scalar_lea.vmem %s0, 10
  %s44 = smov 12
  %v45 = vld [vmem:[%s43] ss:$16 sm:%s44]
  %vm46 = vcmask 1043458
  %v47 = vsel %vm46, %v45, %v42
  %s48 = scalar_lea.vmem %s0, 10
  %s49 = smov 48
  %v50 = vld [vmem:[%s48] ss:$16 sm:%s49]
  %vm51 = vcmask 1045508
  %v52 = vsel %vm51, %v50, %v47
  %s53 = scalar_lea.vmem %s0, 10
  %s54 = smov 192
  %v55 = vld [vmem:[%s53] ss:$16 sm:%s54]
  %vm56 = vcmask 1047558
  %v57 = vsel %vm56, %v55, %v52
  %58 = vrot.lane.b32.xlu0 %v57, 80
  %v59 = vpop.permute.xlu0 %58
  %vm60 = vcmask 720512
  %61 = vst.msk [vmem:[%s1] sm:$0xff] %vm60, %v59
  %s62 = scalar_lea.vmem %s0, 9
  %s63 = smov 3
  %v64 = vld [vmem:[%s62] ss:$16 sm:%s63]
  %s65 = scalar_lea.vmem %s0, 9
  %s66 = smov 12
  %v67 = vld [vmem:[%s65] ss:$16 sm:%s66]
  %vm68 = vcmask 1043458
  %v69 = vsel %vm68, %v67, %v64
  %s70 = scalar_lea.vmem %s0, 9
  %s71 = smov 48
  %v72 = vld [vmem:[%s70] ss:$16 sm:%s71]
  %vm73 = vcmask 1045508
  %v74 = vsel %vm73, %v72, %v69
  %s75 = scalar_lea.vmem %s0, 9
  %s76 = smov 192
  %v77 = vld [vmem:[%s75] ss:$16 sm:%s76]
  %vm78 = vcmask 1047558
  %v79 = vsel %vm78, %v77, %v74
  %80 = vrot.lane.b32.xlu0 %v79, 72
  %v81 = vpop.permute.xlu0 %80
  %vm82 = vcmask 654912
  %83 = vst.msk [vmem:[%s1] sm:$0xff] %vm82, %v81
  %s84 = scalar_lea.vmem %s0, 8
  %s85 = smov 3
  %v86 = vld [vmem:[%s84] ss:$16 sm:%s85]
  %s87 = scalar_lea.vmem %s0, 8
  %s88 = smov 12
  %v89 = vld [vmem:[%s87] ss:$16 sm:%s88]
  %vm90 = vcmask 1043458
  %v91 = vsel %vm90, %v89, %v86
  %s92 = scalar_lea.vmem %s0, 8
  %s93 = smov 48
  %v94 = vld [vmem:[%s92] ss:$16 sm:%s93]
  %vm95 = vcmask 1045508
  %v96 = vsel %vm95, %v94, %v91
  %s97 = scalar_lea.vmem %s0, 8
  %s98 = smov 192
  %v99 = vld [vmem:[%s97] ss:$16 sm:%s98]
  %vm100 = vcmask 1047558
  %v101 = vsel %vm100, %v99, %v96
  %102 = vrot.lane.b32.xlu0 %v101, 64
  %v103 = vpop.permute.xlu0 %102
  %vm104 = vcmask 589312
  %105 = vst.msk [vmem:[%s1] sm:$0xff] %vm104, %v103
  %s106 = scalar_lea.vmem %s0, 7
  %s107 = smov 3
  %v108 = vld [vmem:[%s106] ss:$16 sm:%s107]
  %s109 = scalar_lea.vmem %s0, 7
  %s110 = smov 12
  %v111 = vld [vmem:[%s109] ss:$16 sm:%s110]
  %vm112 = vcmask 1043458
  %v113 = vsel %vm112, %v111, %v108
  %s114 = scalar_lea.vmem %s0, 7
  %s115 = smov 48
  %v116 = vld [vmem:[%s114] ss:$16 sm:%s115]
  %vm117 = vcmask 1045508
  %v118 = vsel %vm117, %v116, %v113
  %s119 = scalar_lea.vmem %s0, 7
  %s120 = smov 192
  %v121 = vld [vmem:[%s119] ss:$16 sm:%s120]
  %vm122 = vcmask 1047558
  %v123 = vsel %vm122, %v121, %v118
  %124 = vrot.lane.b32.xlu0 %v123, 56
  %v125 = vpop.permute.xlu0 %124
  %vm126 = vcmask 523712
  %127 = vst.msk [vmem:[%s1] sm:$0xff] %vm126, %v125
  %s128 = scalar_lea.vmem %s0, 6
  %s129 = smov 3
  %v130 = vld [vmem:[%s128] ss:$16 sm:%s129]
  %s131 = scalar_lea.vmem %s0, 6
  %s132 = smov 12
  %v133 = vld [vmem:[%s131] ss:$16 sm:%s132]
  %vm134 = vcmask 1043458
  %v135 = vsel %vm134, %v133, %v130
  %s136 = scalar_lea.vmem %s0, 6
  %s137 = smov 48
  %v138 = vld [vmem:[%s136] ss:$16 sm:%s137]
  %vm139 = vcmask 1045508
  %v140 = vsel %vm139, %v138, %v135
  %s141 = scalar_lea.vmem %s0, 6
  %s142 = smov 192
  %v143 = vld [vmem:[%s141] ss:$16 sm:%s142]
  %vm144 = vcmask 1047558
  %v145 = vsel %vm144, %v143, %v140
  %146 = vrot.lane.b32.xlu0 %v145, 48
  %v147 = vpop.permute.xlu0 %146
  %vm148 = vcmask 458112
  %149 = vst.msk [vmem:[%s1] sm:$0xff] %vm148, %v147
  %s150 = scalar_lea.vmem %s0, 5
  %s151 = smov 3
  %v152 = vld [vmem:[%s150] ss:$16 sm:%s151]
  %s153 = scalar_lea.vmem %s0, 5
  %s154 = smov 12
  %v155 = vld [vmem:[%s153] ss:$16 sm:%s154]
  %vm156 = vcmask 1043458
  %v157 = vsel %vm156, %v155, %v152
  %s158 = scalar_lea.vmem %s0, 5
  %s159 = smov 48
  %v160 = vld [vmem:[%s158] ss:$16 sm:%s159]
  %vm161 = vcmask 1045508
  %v162 = vsel %vm161, %v160, %v157
  %s163 = scalar_lea.vmem %s0, 5
  %s164 = smov 192
  %v165 = vld [vmem:[%s163] ss:$16 sm:%s164]
  %vm166 = vcmask 1047558
  %v167 = vsel %vm166, %v165, %v162
  %168 = vrot.lane.b32.xlu0 %v167, 40
  %v169 = vpop.permute.xlu0 %168
  %vm170 = vcmask 392512
  %171 = vst.msk [vmem:[%s1] sm:$0xff] %vm170, %v169
  %s172 = scalar_lea.vmem %s0, 4
  %s173 = smov 3
  %v174 = vld [vmem:[%s172] ss:$16 sm:%s173]
  %s175 = scalar_lea.vmem %s0, 4
  %s176 = smov 12
  %v177 = vld [vmem:[%s175] ss:$16 sm:%s176]
  %vm178 = vcmask 1043458
  %v179 = vsel %vm178, %v177, %v174
  %s180 = scalar_lea.vmem %s0, 4
  %s181 = smov 48
  %v182 = vld [vmem:[%s180] ss:$16 sm:%s181]
  %vm183 = vcmask 1045508
  %v184 = vsel %vm183, %v182, %v179
  %s185 = scalar_lea.vmem %s0, 4
  %s186 = smov 192
  %v187 = vld [vmem:[%s185] ss:$16 sm:%s186]
  %vm188 = vcmask 1047558
  %v189 = vsel %vm188, %v187, %v184
  %190 = vrot.lane.b32.xlu0 %v189, 32
  %v191 = vpop.permute.xlu0 %190
  %vm192 = vcmask 326912
  %193 = vst.msk [vmem:[%s1] sm:$0xff] %vm192, %v191
  %s194 = scalar_lea.vmem %s0, 3
  %s195 = smov 3
  %v196 = vld [vmem:[%s194] ss:$16 sm:%s195]
  %s197 = scalar_lea.vmem %s0, 3
  %s198 = smov 12
  %v199 = vld [vmem:[%s197] ss:$16 sm:%s198]
  %vm200 = vcmask 1043458
  %v201 = vsel %vm200, %v199, %v196
  %s202 = scalar_lea.vmem %s0, 3
  %s203 = smov 48
  %v204 = vld [vmem:[%s202] ss:$16 sm:%s203]
  %vm205 = vcmask 1045508
  %v206 = vsel %vm205, %v204, %v201
  %s207 = scalar_lea.vmem %s0, 3
  %s208 = smov 192
  %v209 = vld [vmem:[%s207] ss:$16 sm:%s208]
  %vm210 = vcmask 1047558
  %v211 = vsel %vm210, %v209, %v206
  %212 = vrot.lane.b32.xlu0 %v211, 24
  %v213 = vpop.permute.xlu0 %212
  %vm214 = vcmask 261312
  %215 = vst.msk [vmem:[%s1] sm:$0xff] %vm214, %v213
  %s216 = scalar_lea.vmem %s0, 2
  %s217 = smov 3
  %v218 = vld [vmem:[%s216] ss:$16 sm:%s217]
  %s219 = scalar_lea.vmem %s0, 2
  %s220 = smov 12
  %v221 = vld [vmem:[%s219] ss:$16 sm:%s220]
  %vm222 = vcmask 1043458
  %v223 = vsel %vm222, %v221, %v218
  %s224 = scalar_lea.vmem %s0, 2
  %s225 = smov 48
  %v226 = vld [vmem:[%s224] ss:$16 sm:%s225]
  %vm227 = vcmask 1045508
  %v228 = vsel %vm227, %v226, %v223
  %s229 = scalar_lea.vmem %s0, 2
  %s230 = smov 192
  %v231 = vld [vmem:[%s229] ss:$16 sm:%s230]
  %vm232 = vcmask 1047558
  %v233 = vsel %vm232, %v231, %v228
  %234 = vrot.lane.b32.xlu0 %v233, 16
  %v235 = vpop.permute.xlu0 %234
  %vm236 = vcmask 195712
  %237 = vst.msk [vmem:[%s1] sm:$0xff] %vm236, %v235
  %s238 = scalar_lea.vmem %s0, 1
  %s239 = smov 3
  %v240 = vld [vmem:[%s238] ss:$16 sm:%s239]
  %s241 = scalar_lea.vmem %s0, 1
  %s242 = smov 12
  %v243 = vld [vmem:[%s241] ss:$16 sm:%s242]
  %vm244 = vcmask 1043458
  %v245 = vsel %vm244, %v243, %v240
  %s246 = scalar_lea.vmem %s0, 1
  %s247 = smov 48
  %v248 = vld [vmem:[%s246] ss:$16 sm:%s247]
  %vm249 = vcmask 1045508
  %v250 = vsel %vm249, %v248, %v245
  %s251 = scalar_lea.vmem %s0, 1
  %s252 = smov 192
  %v253 = vld [vmem:[%s251] ss:$16 sm:%s252]
  %vm254 = vcmask 1047558
  %v255 = vsel %vm254, %v253, %v250
  %256 = vrot.lane.b32.xlu0 %v255, 8
  %v257 = vpop.permute.xlu0 %256
  %vm258 = vcmask 130112
  %259 = vst.msk [vmem:[%s1] sm:$0xff] %vm258, %v257

// kernel: tile.24
$region0: #{tile.24}
  %s0 = inlined_call_operand.vmem [shape: f32[8,6,16], index: 0, kind: input, shape index: {}]
  %s1 = inlined_call_operand.vmem [shape: f32[8,96], index: 1, kind: output, shape index: {}]
  %v2 = vld [vmem:[%s0] ss:$8 sm:$0xf]
  %v3 = vld [vmem:[%s0] ss:$8 sm:$0xf0]
  %vm4 = vcmask 1047556
  %v5 = vsel %vm4, %v3, %v2
  %vm6 = vcmask 130048
  %7 = vst.msk [vmem:[%s1] sm:$0xff] %vm6, %v5
  %s8 = scalar_lea.vmem %s0, 5
  %v9 = vld [vmem:[%s8] ss:$8 sm:$0xf]
  %s10 = scalar_lea.vmem %s0, 5
  %v11 = vld [vmem:[%s10] ss:$8 sm:$0xf0]
  %vm12 = vcmask 1047556
  %v13 = vsel %vm12, %v11, %v9
  %14 = vrot.lane.b32.xlu0 %v13, 80
  %v15 = vpop.permute.xlu0 %14
  %vm16 = vcmask 786048
  %17 = vst.msk [vmem:[%s1] sm:$0xff] %vm16, %v15
  %s18 = scalar_lea.vmem %s0, 4
  %v19 = vld [vmem:[%s18] ss:$8 sm:$0xf]
  %s20 = scalar_lea.vmem %s0, 4
  %v21 = vld [vmem:[%s20] ss:$8 sm:$0xf0]
  %vm22 = vcmask 1047556
  %v23 = vsel %vm22, %v21, %v19
  %24 = vrot.lane.b32.xlu0 %v23, 64
  %v25 = vpop.permute.xlu0 %24
  %vm26 = vcmask 654848
  %27 = vst.msk [vmem:[%s1] sm:$0xff] %vm26, %v25
  %s28 = scalar_lea.vmem %s0, 3
  %v29 = vld [vmem:[%s28] ss:$8 sm:$0xf]
  %s30 = scalar_lea.vmem %s0, 3
  %v31 = vld [vmem:[%s30] ss:$8 sm:$0xf0]
  %vm32 = vcmask 1047556
  %v33 = vsel %vm32, %v31, %v29
  %34 = vrot.lane.b32.xlu0 %v33, 48
  %v35 = vpop.permute.xlu0 %34
  %vm36 = vcmask 523648
  %37 = vst.msk [vmem:[%s1] sm:$0xff] %vm36, %v35
  %s38 = scalar_lea.vmem %s0, 2
  %v39 = vld [vmem:[%s38] ss:$8 sm:$0xf]
  %s40 = scalar_lea.vmem %s0, 2
  %v41 = vld [vmem:[%s40] ss:$8 sm:$0xf0]
  %vm42 = vcmask 1047556
  %v43 = vsel %vm42, %v41, %v39
  %44 = vrot.lane.b32.xlu0 %v43, 32
  %v45 = vpop.permute.xlu0 %44
  %vm46 = vcmask 392448
  %47 = vst.msk [vmem:[%s1] sm:$0xff] %vm46, %v45
  %s48 = scalar_lea.vmem %s0, 1
  %v49 = vld [vmem:[%s48] ss:$8 sm:$0xf]
  %s50 = scalar_lea.vmem %s0, 1
  %v51 = vld [vmem:[%s50] ss:$8 sm:$0xf0]
  %vm52 = vcmask 1047556
  %v53 = vsel %vm52, %v51, %v49
  %54 = vrot.lane.b32.xlu0 %v53, 16
  %v55 = vpop.permute.xlu0 %54
  %vm56 = vcmask 261248
  %57 = vst.msk [vmem:[%s1] sm:$0xff] %vm56, %v55

// kernel: raw_global_pointer.1
$region0: #{raw_global_pointer.1}
  #allocation0 [shape = 'u32[]', space=smem, size = 0x4, offset = 0x4, fixed_abs, tag = 'smem constant byte address 0x4 - core index']
  #allocation1 [shape = 'u32[144,128]{1,0:T(1,128)}', space=vmem, size = 0x12000, scoped, tag = 'internal scratch']
  %s0 = inlined_call_operand.vmem [shape: bf16[2,8,32], index: 0, kind: input, shape index: {}]
  %s1 = inlined_call_operand.vmem [shape: bf16[32,96], index: 1, kind: input, shape index: {}]
  %s2 = inlined_call_operand.vmem [shape: f32[1,96], index: 2, kind: input, shape index: {}]
  %s3 = inlined_call_operand.vmem [shape: f32[8,96], index: 3, kind: input, shape index: {}]
  %s4 = inlined_call_operand.vmem [shape: f32[8,96], index: 4, kind: input, shape index: {}]
  %s5 = inlined_call_operand.vmem [shape: f32[8,96], index: 5, kind: input, shape index: {}]
  %s6 = inlined_call_operand.vmem [shape: f32[2,1,8], index: 6, kind: input, shape index: {}]
  %s7 = inlined_call_operand.vmem [shape: f32[2,1,8], index: 7, kind: input, shape index: {}]
  %s8 = inlined_call_operand.vmem [shape: f32[8,8], index: 8, kind: input, shape index: {}]
  %s9 = inlined_call_operand.hbm [shape: f32[2,3,8,8], index: 9, kind: output, shape index: {}]
  %s10 = sld [smem:[#allocation0]]
  $region69: #{raw_global_pointer.1} parent=0
    _
  %s12 = ssub.s32 1, %s10
  %s13 = scalar_select 0, %s12, %s10
  $region1: #{raw_global_pointer.1} parent=0
    #allocation2 [shape = 'u8[24576]{0}', space=vmem, size = 0x6000, scoped, tag = 'output window, operand 0']
    #allocation3 [shape = 's32[2]{0}', space=sflag, size = 0x8, scoped, tag = 'scoped memory for raw_global_pointer.1']
    %14 = vsyncpa [#allocation3], 0
    %s15 = scalar_lea.sflag [#allocation3], 1
    %16 = vsyncpa %s15, 0
    loop: start=0, step=1, limit=4
    $region2: #{raw_global_pointer.1} parent=1 // loop_pre_header
      _
    $region3: #{raw_global_pointer.1} parent=1 // loop_header
      %s18 = sphi 0, %s22
      %p19 = scmp.ge.s32.totalorder %s18, 4
      %s28 = sphi 0, %s30
      %s31 = sphi 0, %s28
      %s32 = sphi 0, %s31
      %s48 = sphi 0, %s32
      %s52 = sphi 0, %s52
      %s54 = sphi 0, %s52
      %s55 = sphi 0, %s54
      %s69 = sphi 0, %s55
      %s73 = sphi 0, %s73
      %s75 = sphi 0, %s73
      %s76 = sphi 0, %s75
      %s90 = sphi 0, %s76
      %s94 = sphi 0, %s94
      %s96 = sphi 0, %s94
      %s97 = sphi 0, %s96
      %s111 = sphi 0, %s97
      %s115 = sphi 0, %s115
      %s117 = sphi 0, %s115
      %s118 = sphi 0, %s117
      %s132 = sphi 0, %s118
      %s136 = sphi 0, %s136
      %s138 = sphi 0, %s136
      %s139 = sphi 0, %s138
      %s153 = sphi 0, %s139
      %s159 = sphi 0, %s161
      %s162 = sphi 0, %s159
      %s163 = sphi 0, %s162
      %s179 = sphi 0, %s163
      %s185 = sphi 0, %s187
      %s188 = sphi 0, %s185
      %s189 = sphi 0, %s188
      %s205 = sphi 0, %s189
      %s209 = sphi 0, %s209
      %s211 = sphi 0, %s209
      %s212 = sphi 0, %s211
      %s226 = sphi 0, %s212
      %s232 = sphi 0, %s234
      %s235 = sphi 0, %s232
      %s236 = sphi 0, %s235
      %s252 = sphi 0, %s236
    $region4: #{raw_global_pointer.1} parent=1 // loop_header_branch
      %21 = sbr.rel (%p19) target = $region8
    $region5: #{raw_global_pointer.1} parent=1 // loop_body
      %s23 = ssub.s32 %s18, 1
      %s24 = ssub.s32 %s18, 2
      %s25 = sadd.s32 %s18, 1
      %s26 = ssub.s32 %s18, %s25
      %p27 = scmp.eq.s32.totalorder %s26, 0
      %s29 = sadd.s32 %s28, 1
      %s30 = scalar_select %p27, %s28, %s29
      %p33 = pneg %p27
      %p34 = scmp.eq.s32.totalorder %s18, 1
      %p35 = por %p33, %p34
      %p36 = scmp.ne.s32.totalorder %s28, %s31
      %p37 = scmp.eq.s32.totalorder %s18, 0
      %p38 = por %p36, %p37
      %p39 = scmp.ne.s32.totalorder %s28, %s31
      %p40 = scmp.eq.s32.totalorder %s23, 1
      %p41 = por %p39, %p40
      %p42 = scmp.ne.s32.totalorder %s31, %s32
      %p43 = scmp.eq.s32.totalorder %s23, 0
      %p44 = por %p42, %p43
      %p45 = scmp.ne.s32.totalorder %s31, %s32
      %p46 = scmp.eq.s32.totalorder %s24, 1
      %p47 = por %p45, %p46
      %p49 = scmp.ne.s32.totalorder %s32, %s48
      %p50 = scmp.eq.s32.totalorder %s24, 0
      %p51 = por %p49, %p50
      %s53 = sadd.s32 %s52, 1
      %p56 = scmp.eq.s32.totalorder %s18, 1
      %p57 = scmp.ne.s32.totalorder %s52, %s54
      %p58 = scmp.eq.s32.totalorder %s18, 0
      %p59 = por %p57, %p58
      %p60 = scmp.ne.s32.totalorder %s52, %s54
      %p61 = scmp.eq.s32.totalorder %s23, 1
      %p62 = por %p60, %p61
      %p63 = scmp.ne.s32.totalorder %s54, %s55
      %p64 = scmp.eq.s32.totalorder %s23, 0
      %p65 = por %p63, %p64
      %p66 = scmp.ne.s32.totalorder %s54, %s55
      %p67 = scmp.eq.s32.totalorder %s24, 1
      %p68 = por %p66, %p67
      %p70 = scmp.ne.s32.totalorder %s55, %s69
      %p71 = scmp.eq.s32.totalorder %s24, 0
      %p72 = por %p70, %p71
      %s74 = sadd.s32 %s73, 1
      %p77 = scmp.eq.s32.totalorder %s18, 1
      %p78 = scmp.ne.s32.totalorder %s73, %s75
      %p79 = scmp.eq.s32.totalorder %s18, 0
      %p80 = por %p78, %p79
      %p81 = scmp.ne.s32.totalorder %s73, %s75
      %p82 = scmp.eq.s32.totalorder %s23, 1
      %p83 = por %p81, %p82
      %p84 = scmp.ne.s32.totalorder %s75, %s76
      %p85 = scmp.eq.s32.totalorder %s23, 0
      %p86 = por %p84, %p85
      %p87 = scmp.ne.s32.totalorder %s75, %s76
      %p88 = scmp.eq.s32.totalorder %s24, 1
      %p89 = por %p87, %p88
      %p91 = scmp.ne.s32.totalorder %s76, %s90
      %p92 = scmp.eq.s32.totalorder %s24, 0
      %p93 = por %p91, %p92
      %s95 = sadd.s32 %s94, 1
      %p98 = scmp.eq.s32.totalorder %s18, 1
      %p99 = scmp.ne.s32.totalorder %s94, %s96
      %p100 = scmp.eq.s32.totalorder %s18, 0
      %p101 = por %p99, %p100
      %p102 = scmp.ne.s32.totalorder %s94, %s96
      %p103 = scmp.eq.s32.totalorder %s23, 1
      %p104 = por %p102, %p103
      %p105 = scmp.ne.s32.totalorder %s96, %s97
      %p106 = scmp.eq.s32.totalorder %s23, 0
      %p107 = por %p105, %p106
      %p108 = scmp.ne.s32.totalorder %s96, %s97
      %p109 = scmp.eq.s32.totalorder %s24, 1
      %p110 = por %p108, %p109
      %p112 = scmp.ne.s32.totalorder %s97, %s111
      %p113 = scmp.eq.s32.totalorder %s24, 0
      %p114 = por %p112, %p113
      %s116 = sadd.s32 %s115, 1
      %p119 = scmp.eq.s32.totalorder %s18, 1
      %p120 = scmp.ne.s32.totalorder %s115, %s117
      %p121 = scmp.eq.s32.totalorder %s18, 0
      %p122 = por %p120, %p121
      %p123 = scmp.ne.s32.totalorder %s115, %s117
      %p124 = scmp.eq.s32.totalorder %s23, 1
      %p125 = por %p123, %p124
      %p126 = scmp.ne.s32.totalorder %s117, %s118
      %p127 = scmp.eq.s32.totalorder %s23, 0
      %p128 = por %p126, %p127
      %p129 = scmp.ne.s32.totalorder %s117, %s118
      %p130 = scmp.eq.s32.totalorder %s24, 1
      %p131 = por %p129, %p130
      %p133 = scmp.ne.s32.totalorder %s118, %s132
      %p134 = scmp.eq.s32.totalorder %s24, 0
      %p135 = por %p133, %p134
      %s137 = sadd.s32 %s136, 1
      %p140 = scmp.eq.s32.totalorder %s18, 1
      %p141 = scmp.ne.s32.totalorder %s136, %s138
      %p142 = scmp.eq.s32.totalorder %s18, 0
      %p143 = por %p141, %p142
      %p144 = scmp.ne.s32.totalorder %s136, %s138
      %p145 = scmp.eq.s32.totalorder %s23, 1
      %p146 = por %p144, %p145
      %p147 = scmp.ne.s32.totalorder %s138, %s139
      %p148 = scmp.eq.s32.totalorder %s23, 0
      %p149 = por %p147, %p148
      %p150 = scmp.ne.s32.totalorder %s138, %s139
      %p151 = scmp.eq.s32.totalorder %s24, 1
      %p152 = por %p150, %p151
      %p154 = scmp.ne.s32.totalorder %s139, %s153
      %p155 = scmp.eq.s32.totalorder %s24, 0
      %p156 = por %p154, %p155
      %s157 = ssub.s32 %s18, %s25
      %p158 = scmp.eq.s32.totalorder %s157, 0
      %s160 = sadd.s32 %s159, 1
      %s161 = scalar_select %p158, %s159, %s160
      %p164 = pneg %p158
      %p165 = scmp.eq.s32.totalorder %s18, 1
      %p166 = por %p164, %p165
      %p167 = scmp.ne.s32.totalorder %s159, %s162
      %p168 = scmp.eq.s32.totalorder %s18, 0
      %p169 = por %p167, %p168
      %p170 = scmp.ne.s32.totalorder %s159, %s162
      %p171 = scmp.eq.s32.totalorder %s23, 1
      %p172 = por %p170, %p171
      %p173 = scmp.ne.s32.totalorder %s162, %s163
      %p174 = scmp.eq.s32.totalorder %s23, 0
      %p175 = por %p173, %p174
      %p176 = scmp.ne.s32.totalorder %s162, %s163
      %p177 = scmp.eq.s32.totalorder %s24, 1
      %p178 = por %p176, %p177
      %p180 = scmp.ne.s32.totalorder %s163, %s179
      %p181 = scmp.eq.s32.totalorder %s24, 0
      %p182 = por %p180, %p181
      %s183 = ssub.s32 %s18, %s25
      %p184 = scmp.eq.s32.totalorder %s183, 0
      %s186 = sadd.s32 %s185, 1
      %s187 = scalar_select %p184, %s185, %s186
      %p190 = pneg %p184
      %p191 = scmp.eq.s32.totalorder %s18, 1
      %p192 = por %p190, %p191
      %p193 = scmp.ne.s32.totalorder %s185, %s188
      %p194 = scmp.eq.s32.totalorder %s18, 0
      %p195 = por %p193, %p194
      %p196 = scmp.ne.s32.totalorder %s185, %s188
      %p197 = scmp.eq.s32.totalorder %s23, 1
      %p198 = por %p196, %p197
      %p199 = scmp.ne.s32.totalorder %s188, %s189
      %p200 = scmp.eq.s32.totalorder %s23, 0
      %p201 = por %p199, %p200
      %p202 = scmp.ne.s32.totalorder %s188, %s189
      %p203 = scmp.eq.s32.totalorder %s24, 1
      %p204 = por %p202, %p203
      %p206 = scmp.ne.s32.totalorder %s189, %s205
      %p207 = scmp.eq.s32.totalorder %s24, 0
      %p208 = por %p206, %p207
      %s210 = sadd.s32 %s209, 1
      %p213 = scmp.eq.s32.totalorder %s18, 1
      %p214 = scmp.ne.s32.totalorder %s209, %s211
      %p215 = scmp.eq.s32.totalorder %s18, 0
      %p216 = por %p214, %p215
      %p217 = scmp.ne.s32.totalorder %s209, %s211
      %p218 = scmp.eq.s32.totalorder %s23, 1
      %p219 = por %p217, %p218
      %p220 = scmp.ne.s32.totalorder %s211, %s212
      %p221 = scmp.eq.s32.totalorder %s23, 0
      %p222 = por %p220, %p221
      %p223 = scmp.ne.s32.totalorder %s211, %s212
      %p224 = scmp.eq.s32.totalorder %s24, 1
      %p225 = por %p223, %p224
      %p227 = scmp.ne.s32.totalorder %s212, %s226
      %p228 = scmp.eq.s32.totalorder %s24, 0
      %p229 = por %p227, %p228
      %s230 = ssub.s32 %s18, %s25
      %p231 = scmp.eq.s32.totalorder %s230, 0
      %s233 = sadd.s32 %s232, 1
      %s234 = scalar_select %p231, %s232, %s233
      %p237 = pneg %p231
      %p238 = scmp.eq.s32.totalorder %s18, 1
      %p239 = por %p237, %p238
      %p240 = scmp.ne.s32.totalorder %s232, %s235
      %p241 = scmp.eq.s32.totalorder %s18, 0
      %p242 = por %p240, %p241
      %p243 = scmp.ne.s32.totalorder %s232, %s235
      %p244 = scmp.eq.s32.totalorder %s23, 1
      %p245 = por %p243, %p244
      %p246 = scmp.ne.s32.totalorder %s235, %s236
      %p247 = scmp.eq.s32.totalorder %s23, 0
      %p248 = por %p246, %p247
      %p249 = scmp.ne.s32.totalorder %s235, %s236
      %p250 = scmp.eq.s32.totalorder %s24, 1
      %p251 = por %p249, %p250
      %p253 = scmp.ne.s32.totalorder %s236, %s252
      %p254 = scmp.eq.s32.totalorder %s24, 0
      %p255 = por %p253, %p254
      %p256 = scmp.le.s32.totalorder 1, %s18
      %p257 = scmp.lt.s32.totalorder %s18, 3
      %p258 = pnand %p256, %p257
      %p259 = pneg %p258
      // Predicated region
      $region9: #{raw_global_pointer.1} parent=5 // pred_check
        _
      $region10: #{raw_global_pointer.1} parent=5 // pred_check_branch
        %261 = sbr.rel (%p258) target = $region12
      $region11: #{raw_global_pointer.1} parent=5 // pred_region
        %s262 = ssub.s32 %s18, 1
        // Predicated region
        $region13: #{raw_global_pointer.1} parent=11 // pred_check
          %p263 = pneg %p65
        $region14: #{raw_global_pointer.1} parent=11 // pred_check_branch
          %265 = sbr.rel (%p263) target = $region16
        $region15: #{raw_global_pointer.1} parent=11 // pred_region
          _
        $region16: #{raw_global_pointer.1} parent=11 // pred_fallthru
          _
        // Predicated region
        $region17: #{raw_global_pointer.1} parent=11 // pred_check
          %p266 = pneg %p86
        $region18: #{raw_global_pointer.1} parent=11 // pred_check_branch
          %268 = sbr.rel (%p266) target = $region20
        $region19: #{raw_global_pointer.1} parent=11 // pred_region
          _
        $region20: #{raw_global_pointer.1} parent=11 // pred_fallthru
          _
        // Predicated region
        $region21: #{raw_global_pointer.1} parent=11 // pred_check
          %p269 = pneg %p107
        $region22: #{raw_global_pointer.1} parent=11 // pred_check_branch
          %271 = sbr.rel (%p269) target = $region24
        $region23: #{raw_global_pointer.1} parent=11 // pred_region
          _
        $region24: #{raw_global_pointer.1} parent=11 // pred_fallthru
          _
        // Predicated region
        $region25: #{raw_global_pointer.1} parent=11 // pred_check
          %p272 = pneg %p128
        $region26: #{raw_global_pointer.1} parent=11 // pred_check_branch
          %274 = sbr.rel (%p272) target = $region28
        $region27: #{raw_global_pointer.1} parent=11 // pred_region
          _
        $region28: #{raw_global_pointer.1} parent=11 // pred_fallthru
          _
        // Predicated region
        $region29: #{raw_global_pointer.1} parent=11 // pred_check
          %p275 = pneg %p149
        $region30: #{raw_global_pointer.1} parent=11 // pred_check_branch
          %277 = sbr.rel (%p275) target = $region32
        $region31: #{raw_global_pointer.1} parent=11 // pred_region
          _
        $region32: #{raw_global_pointer.1} parent=11 // pred_fallthru
          _
        // Predicated region
        $region33: #{raw_global_pointer.1} parent=11 // pred_check
          %p278 = pneg %p222
        $region34: #{raw_global_pointer.1} parent=11 // pred_check_branch
          %280 = sbr.rel (%p278) target = $region36
        $region35: #{raw_global_pointer.1} parent=11 // pred_region
          _
        $region36: #{raw_global_pointer.1} parent=11 // pred_fallthru
          _
      $region12: #{raw_global_pointer.1} parent=5 // pred_fallthru
        _
      %p281 = scmp.lt.s32.totalorder %s18, 2
      // Predicated region
      $region37: #{raw_global_pointer.1} parent=5 // pred_check
        %p282 = pneg %p281
      $region38: #{raw_global_pointer.1} parent=5 // pred_check_branch
        %284 = sbr.rel (%p282) target = $region40
      $region39: #{raw_global_pointer.1} parent=5 // pred_region
        // Predicated region
        $region41: #{raw_global_pointer.1} parent=39 // pred_check
          %p285 = pneg %p38
        $region42: #{raw_global_pointer.1} parent=39 // pred_check_branch
          %287 = sbr.rel (%p285) target = $region44
        $region43: #{raw_global_pointer.1} parent=39 // pred_region
          %p288 = scmp.lt.s32.totalorder %s18, 1
          %s289 = scalar_select %p288, %s18, 1
          %s290 = smul.addr %s289, 4
          %s291 = scalar_lea.vmem %s0, %s290
        $region44: #{raw_global_pointer.1} parent=39 // pred_fallthru
          _
        // Predicated region
        $region45: #{raw_global_pointer.1} parent=39 // pred_check
          %p292 = pneg %p169
        $region46: #{raw_global_pointer.1} parent=39 // pred_check_branch
          %294 = sbr.rel (%p292) target = $region48
        $region47: #{raw_global_pointer.1} parent=39 // pred_region
          %p295 = scmp.lt.s32.totalorder %s18, 1
          %s296 = scalar_select %p295, %s18, 1
          %s297 = scalar_lea.vmem %s6, %s296
        $region48: #{raw_global_pointer.1} parent=39 // pred_fallthru
          _
        // Predicated region
        $region49: #{raw_global_pointer.1} parent=39 // pred_check
          %p298 = pneg %p195
        $region50: #{raw_global_pointer.1} parent=39 // pred_check_branch
          %300 = sbr.rel (%p298) target = $region52
        $region51: #{raw_global_pointer.1} parent=39 // pred_region
          %p301 = scmp.lt.s32.totalorder %s18, 1
          %s302 = scalar_select %p301, %s18, 1
          %s303 = scalar_lea.vmem %s7, %s302
        $region52: #{raw_global_pointer.1} parent=39 // pred_fallthru
          _
      $region40: #{raw_global_pointer.1} parent=5 // pred_fallthru
        _
      %p304 = scmp.le.s32.totalorder 1, %s18
      %p305 = scmp.lt.s32.totalorder %s18, 3
      %p306 = pnand %p304, %p305
      %p307 = pneg %p306
      // Predicated region
      $region53: #{raw_global_pointer.1} parent=5 // pred_check
        _
      $region54: #{raw_global_pointer.1} parent=5 // pred_check_branch
        %309 = sbr.rel (%p306) target = $region56
      $region55: #{raw_global_pointer.1} parent=5 // pred_region
        %s310 = ssub.s32 %s18, 1
        %p311 = scmp.lt.s32.totalorder %s23, 1
        %s312 = scalar_select %p311, %s23, 1
        %s313 = smul.addr %s312, 4
        %s314 = scalar_lea.vmem %s0, %s313
        %p315 = pneg %p44
        %p316 = pneg %p41
        %p317 = pneg %p65
        %p318 = pneg %p62
        %p319 = pneg %p86
        %p320 = pneg %p83
        %p321 = pneg %p107
        %p322 = pneg %p104
        %p323 = pneg %p128
        %p324 = pneg %p125
        %p325 = pneg %p149
        %p326 = pneg %p146
        %p327 = scmp.lt.s32.totalorder %s23, 1
        %s328 = scalar_select %p327, %s23, 1
        %s329 = scalar_lea.vmem %s6, %s328
        %p330 = pneg %p175
        %p331 = pneg %p172
        %p332 = scmp.lt.s32.totalorder %s23, 1
        %s333 = scalar_select %p332, %s23, 1
        %s334 = scalar_lea.vmem %s7, %s333
        %p335 = pneg %p201
        %p336 = pneg %p198
        %p337 = pneg %p222
        %p338 = pneg %p219
        %p339 = pneg %p248
        %p340 = pneg %p245
        %s341 = sand.u32 %s235, 1
        %s342 = scalar_lea.sflag [#allocation3], %s341
        %s343 = sand.u32 %s235, 1
        %s344 = smul.addr %s343, 24
        %s345 = scalar_lea.vmem [#allocation2], %s344
        %p346 = scmp.lt.s32.totalorder %s23, 1
        %s347 = scalar_select %p346, %s23, 1
        %s348 = smul.addr %s347, 4
        %s349 = scalar_lea.vmem %s0, %s348
        %p350 = scmp.lt.s32.totalorder %s23, 1
        %s351 = scalar_select %p350, %s23, 1
        %s352 = scalar_lea.vmem %s6, %s351
        %p353 = scmp.lt.s32.totalorder %s23, 1
        %s354 = scalar_select %p353, %s23, 1
        %s355 = scalar_lea.vmem %s7, %s354
        %v357 = vld [vmem:[%s349] sm:$0xf]
        %v358 = vld [vmem:[%s1] sm:$0xf]
        %v359 = vld [vmem:[%s1 + $0x4] sm:$0xf]
        %v360 = vld [vmem:[%s1 + $0x8] sm:$0xf]
        %v361 = vld [vmem:[%s1 + $0xc] sm:$0xf]
        %v362 = vld [vmem:[%s2] sm:$0x1]
        %v364 = vlaneseq
        %v365 = vshrl.u32 %v364, 7
        %v366 = vsub.s32 0, %v365
        %v367 = vrot.slane %v362, %v366
        %v373 = vunpack.c.l.b16 %v358
        %v374 = vunpack.c.l.b16 %v359
        %v375 = vunpack.c.l.b16 %v360
        %v376 = vunpack.c.l.b16 %v361
        %v377 = vpack.c.b16 %v374, %v373
        %v378 = vpack.c.b16 %v376, %v375
        %vm381 = vcmask 261120
        %v383 = vsel %vm381, %v357, 0
        %385 = vmatprep.subr.bf16.mxu0 0
        %386 = vmatpush1.bf16.msra.mxu0 %v377
        %387 = vmatprep.subr.bf16.mxu0 0
        %388 = vmatpush1.bf16.msra.mxu0 %v378
        %389 = vmatprep.subr.bf16.mxu0 0
        %390 = vmatpush1.bf16.msra.mxu0 0
        %391 = vmatprep.subr.bf16.mxu0 0
        %392 = vmatpush1.bf16.msra.mxu0 0
        %393 = vmatprep.subr.bf16.mxu0 0
        %394 = vmatpush1.bf16.msra.mxu0 0
        %395 = vmatprep.subr.bf16.mxu0 0
        %396 = vmatpush1.bf16.msra.mxu0 0
        %397 = vmatprep.subr.bf16.mxu0 0
        %398 = vmatpush1.bf16.msra.mxu0 0
        %399 = vmatprep.subr.bf16.mxu0 0
        %400 = vmatpush1.bf16.msra.mxu0 0
        %401 = vmatprep.subr.bf16.mxu0 0
        %402 = vmatpush1.bf16.msra.mxu0 0
        %403 = vmatprep.subr.bf16.mxu0 0
        %404 = vmatpush1.bf16.msra.mxu0 0
        %405 = vmatprep.subr.bf16.mxu0 0
        %406 = vmatpush1.bf16.msra.mxu0 0
        %407 = vmatprep.subr.bf16.mxu0 0
        %408 = vmatpush1.bf16.msra.mxu0 0
        %409 = vmatprep.subr.bf16.mxu0 0
        %410 = vmatpush1.bf16.msra.mxu0 0
        %411 = vmatprep.subr.bf16.mxu0 0
        %412 = vmatpush1.bf16.msra.mxu0 0
        %413 = vmatprep.subr.bf16.mxu0 0
        %414 = vmatpush1.bf16.msra.mxu0 0
        %415 = vmatprep.subr.bf16.mxu0 0
        %416 = vmatpush1.bf16.msra.mxu0 0
        %417 = vmatprep.mubr.bf16.mxu0 0
        %418 = vmatmul.mubr.bf16.gmra.mrb[0].mxu0 %v383
        %v419 = vpop.f32.mrb[0].mxu0
        %v420 = vadd.f32 %v367, %v419
        %v421 = vpop.f32.mrb[0].mxu0
        %v422 = vpop.f32.mrb[0].mxu0
        %v423 = vpop.f32.mrb[0].mxu0
        %424 = vdwg.mxu0
        %v425 = vld [vmem:[%s3] sm:$0xff]
        %v426 = vmul.f32 %v420, %v425
        %vm427 = vcmask 1048320
        %428 = vrot.lane.b32.xlu0 %v420, 96
        %v429 = vpop.permute.xlu0 %428
        %v430 = vsel %vm427, %v429, %v420
        %431 = vrot.lane.b32.xlu0 %v430, 96
        %v432 = vpop.permute.xlu0 %431
        %v433 = vsel %vm427, %v432, %v420
        %v434 = vld [vmem:[%s4] sm:$0xff]
        %436 = vrot.lane.b32.xlu0 %v434, 8
        %v437 = vpop.permute.xlu0 %436
        %v439 = vmul.f32 %v433, %v437
        %441 = vrot.lane.b32.xlu0 %v439, 120
        %v442 = vpop.permute.xlu0 %441
        %v444 = vadd.f32 %v426, %v442
        %v445 = vld [vmem:[%s5] sm:$0xff]
        %447 = vrot.lane.b32.xlu0 %v445, 88
        %v448 = vpop.permute.xlu0 %447
        %v450 = vmul.f32 %v433, %v448
        %v451 = vmul.f32 %v432, %v448
        %454 = vrot.lane.b32.xlu0 %v450, 40
        %v455 = vpop.permute.xlu0 %454
        %456 = vrot.lane.b32.xlu0 %v451, 40
        %v457 = vpop.permute.xlu0 %456
        %vm458 = vcmask 326656
        %v459 = vsel %vm458, %v455, %v457
        %v461 = vadd.f32 %v444, %v459
        %v462 = vpack.c.bf16 %v461, %v461
        %v463 = vld [vmem:[%s352] sm:$0x1]
        %v465 = vlaneseq
        %v466 = vshrl.u32 %v465, 7
        %v467 = vsub.s32 0, %v466
        %v468 = vrot.slane %v463, %v467
        %v470 = vld [vmem:[%s355] sm:$0x1]
        %v471 = vld [vmem:[%s8] sm:$0xff]
        %v473 = vlaneseq
        %v474 = vshrl.u32 %v473, 7
        %v475 = vsub.s32 0, %v474
        %v476 = vrot.slane %v470, %v475
        %v478 = vadd.f32 %v476, %v471
        %480 = vrot.lane.b32.xlu0 %v462, 112
        %v481 = vpop.permute.xlu0 %480
        %vm482 = vcmask 130048
        %v484 = vsel %vm482, %v462, 0
        %v487 = vsel %vm482, %v481, 0
        %489 = vmatprep.subr.bf16.mxu0 0
        %490 = vmatpush1.bf16.xpose.msra.mxu0 %v487
        %491 = vmatprep.subr.bf16.mxu0 0
        %492 = vmatpush1.bf16.xpose.msra.mxu0 0
        %493 = vmatprep.subr.bf16.mxu0 0
        %494 = vmatpush1.bf16.xpose.msra.mxu0 0
        %495 = vmatprep.subr.bf16.mxu0 0
        %496 = vmatpush1.bf16.xpose.msra.mxu0 0
        %497 = vmatprep.subr.bf16.mxu0 0
        %498 = vmatpush1.bf16.xpose.msra.mxu0 0
        %499 = vmatprep.subr.bf16.mxu0 0
        %500 = vmatpush1.bf16.xpose.msra.mxu0 0
        %501 = vmatprep.subr.bf16.mxu0 0
        %502 = vmatpush1.bf16.xpose.msra.mxu0 0
        %503 = vmatprep.subr.bf16.mxu0 0
        %504 = vmatpush1.bf16.xpose.msra.mxu0 0
        %505 = vmatprep.subr.bf16.mxu0 0
        %506 = vmatpush1.bf16.xpose.msra.mxu0 0
        %507 = vmatprep.subr.bf16.mxu0 0
        %508 = vmatpush1.bf16.xpose.msra.mxu0 0
        %509 = vmatprep.subr.bf16.mxu0 0
        %510 = vmatpush1.bf16.xpose.msra.mxu0 0
        %511 = vmatprep.subr.bf16.mxu0 0
        %512 = vmatpush1.bf16.xpose.msra.mxu0 0
        %513 = vmatprep.subr.bf16.mxu0 0
        %514 = vmatpush1.bf16.xpose.msra.mxu0 0
        %515 = vmatprep.subr.bf16.mxu0 0
        %516 = vmatpush1.bf16.xpose.msra.mxu0 0
        %517 = vmatprep.subr.bf16.mxu0 0
        %518 = vmatpush1.bf16.xpose.msra.mxu0 0
        %519 = vmatprep.subr.bf16.mxu0 0
        %520 = vmatpush1.bf16.xpose.msra.mxu0 0
        %521 = vmatprep.mubr.bf16.mxu0 0
        %522 = vmatmul.mubr.bf16.gmra.mrb[0].mxu0 %v484
        %v523 = vpop.f32.mrb[0].mxu0
        %v524 = vadd.f32 0.0, %v523
        %v525 = vpop.f32.mrb[0].mxu0
        %v526 = vpop.f32.mrb[0].mxu0
        %v527 = vpop.f32.mrb[0].mxu0
        %528 = vdwg.mxu0
        %v529 = vmul.f32 %v524, %v468
        %v530 = vadd.f32 %v529, %v478
        %vm531 = vcmask 64512
        %532 = vst.msk [vmem:[%s345] sm:$0xff] %vm531, %v530
        %533 = vrot.lane.b32.xlu0 %v462, 96
        %v534 = vpop.permute.xlu0 %533
        %535 = vrot.lane.b32.xlu0 %v462, 80
        %v536 = vpop.permute.xlu0 %535
        %v538 = vsel %vm482, %v534, 0
        %v541 = vsel %vm482, %v536, 0
        %543 = vmatprep.subr.bf16.mxu0 0
        %544 = vmatpush1.bf16.xpose.msra.mxu0 %v541
        %545 = vmatprep.subr.bf16.mxu0 0
        %546 = vmatpush1.bf16.xpose.msra.mxu0 0
        %547 = vmatprep.subr.bf16.mxu0 0
        %548 = vmatpush1.bf16.xpose.msra.mxu0 0
        %549 = vmatprep.subr.bf16.mxu0 0
        %550 = vmatpush1.bf16.xpose.msra.mxu0 0
        %551 = vmatprep.subr.bf16.mxu0 0
        %552 = vmatpush1.bf16.xpose.msra.mxu0 0
        %553 = vmatprep.subr.bf16.mxu0 0
        %554 = vmatpush1.bf16.xpose.msra.mxu0 0
        %555 = vmatprep.subr.bf16.mxu0 0
        %556 = vmatpush1.bf16.xpose.msra.mxu0 0
        %557 = vmatprep.subr.bf16.mxu0 0
        %558 = vmatpush1.bf16.xpose.msra.mxu0 0
        %559 = vmatprep.subr.bf16.mxu0 0
        %560 = vmatpush1.bf16.xpose.msra.mxu0 0
        %561 = vmatprep.subr.bf16.mxu0 0
        %562 = vmatpush1.bf16.xpose.msra.mxu0 0
        %563 = vmatprep.subr.bf16.mxu0 0
        %564 = vmatpush1.bf16.xpose.msra.mxu0 0
        %565 = vmatprep.subr.bf16.mxu0 0
        %566 = vmatpush1.bf16.xpose.msra.mxu0 0
        %567 = vmatprep.subr.bf16.mxu0 0
        %568 = vmatpush1.bf16.xpose.msra.mxu0 0
        %569 = vmatprep.subr.bf16.mxu0 0
        %570 = vmatpush1.bf16.xpose.msra.mxu0 0
        %571 = vmatprep.subr.bf16.mxu0 0
        %572 = vmatpush1.bf16.xpose.msra.mxu0 0
        %573 = vmatprep.subr.bf16.mxu0 0
        %574 = vmatpush1.bf16.xpose.msra.mxu0 0
        %575 = vmatprep.mubr.bf16.mxu0 0
        %576 = vmatmul.mubr.bf16.gmra.mrb[0].mxu0 %v538
        %v577 = vpop.f32.mrb[0].mxu0
        %v578 = vadd.f32 0.0, %v577
        %v579 = vpop.f32.mrb[0].mxu0
        %v580 = vpop.f32.mrb[0].mxu0
        %v581 = vpop.f32.mrb[0].mxu0
        %582 = vdwg.mxu0
        %v583 = vmul.f32 %v578, %v468
        %v584 = vadd.f32 %v583, %v478
        %s585 = scalar_lea.vmem %s345, 8 [#allocation2]
        %586 = vst.msk [vmem:[%s585] sm:$0xff] %vm531, %v584
        %587 = vrot.lane.b32.xlu0 %v462, 64
        %v588 = vpop.permute.xlu0 %587
        %589 = vrot.lane.b32.xlu0 %v462, 48
        %v590 = vpop.permute.xlu0 %589
        %v592 = vsel %vm482, %v588, 0
        %v595 = vsel %vm482, %v590, 0
        %597 = vmatprep.subr.bf16.mxu0 0
        %598 = vmatpush1.bf16.xpose.msra.mxu0 %v595
        %599 = vmatprep.subr.bf16.mxu0 0
        %600 = vmatpush1.bf16.xpose.msra.mxu0 0
        %601 = vmatprep.subr.bf16.mxu0 0
        %602 = vmatpush1.bf16.xpose.msra.mxu0 0
        %603 = vmatprep.subr.bf16.mxu0 0
        %604 = vmatpush1.bf16.xpose.msra.mxu0 0
        %605 = vmatprep.subr.bf16.mxu0 0
        %606 = vmatpush1.bf16.xpose.msra.mxu0 0
        %607 = vmatprep.subr.bf16.mxu0 0
        %608 = vmatpush1.bf16.xpose.msra.mxu0 0
        %609 = vmatprep.subr.bf16.mxu0 0
        %610 = vmatpush1.bf16.xpose.msra.mxu0 0
        %611 = vmatprep.subr.bf16.mxu0 0
        %612 = vmatpush1.bf16.xpose.msra.mxu0 0
        %613 = vmatprep.subr.bf16.mxu0 0
        %614 = vmatpush1.bf16.xpose.msra.mxu0 0
        %615 = vmatprep.subr.bf16.mxu0 0
        %616 = vmatpush1.bf16.xpose.msra.mxu0 0
        %617 = vmatprep.subr.bf16.mxu0 0
        %618 = vmatpush1.bf16.xpose.msra.mxu0 0
        %619 = vmatprep.subr.bf16.mxu0 0
        %620 = vmatpush1.bf16.xpose.msra.mxu0 0
        %621 = vmatprep.subr.bf16.mxu0 0
        %622 = vmatpush1.bf16.xpose.msra.mxu0 0
        %623 = vmatprep.subr.bf16.mxu0 0
        %624 = vmatpush1.bf16.xpose.msra.mxu0 0
        %625 = vmatprep.subr.bf16.mxu0 0
        %626 = vmatpush1.bf16.xpose.msra.mxu0 0
        %627 = vmatprep.subr.bf16.mxu0 0
        %628 = vmatpush1.bf16.xpose.msra.mxu0 0
        %629 = vmatprep.mubr.bf16.mxu0 0
        %630 = vmatmul.mubr.bf16.gmra.mrb[0].mxu0 %v592
        %v631 = vpop.f32.mrb[0].mxu0
        %v632 = vadd.f32 0.0, %v631
        %v633 = vpop.f32.mrb[0].mxu0
        %v634 = vpop.f32.mrb[0].mxu0
        %v635 = vpop.f32.mrb[0].mxu0
        %636 = vdwg.mxu0
        %v637 = vmul.f32 %v632, %v468
        %v638 = vadd.f32 %v637, %v478
        %s639 = scalar_lea.vmem %s345, 16 [#allocation2]
        %640 = vst.msk [vmem:[%s639] sm:$0xff] %vm531, %v638
        %s641 = sand.u32 %s235, 1
        %s642 = scalar_lea.sflag [#allocation3], %s641
        %s643 = sand.u32 %s235, 1
        %s644 = smul.addr %s643, 24
        %s645 = scalar_lea.vmem [#allocation2], %s644
        // Predicated region
        $region57: #{raw_global_pointer.1} parent=55 // pred_check
          %p646 = pneg %p245
        $region58: #{raw_global_pointer.1} parent=55 // pred_check_branch
          %648 = sbr.rel (%p646) target = $region60
        $region59: #{raw_global_pointer.1} parent=55 // pred_region
          %s650 = ssub.s32 384, 384
          %651 = vsyncadd %s642, %s650
          %s652 = smul.addr %s23, 3
          %s653 = smul.addr %s652, 128
          %s654 = scalar_lea.hbm %s9, %s653
          %s655 = sshll.u32 %s645, 4
          %s656 = int_to_ptr.vmem [resolvable:$true] %s655
          %661 = dma.vmem_to_hbm [thread:$0]  %s656, 384, %s654, %s642, 128, 128, 8
        $region60: #{raw_global_pointer.1} parent=55 // pred_fallthru
          _
      $region56: #{raw_global_pointer.1} parent=5 // pred_fallthru
        _
      %p662 = scmp.le.s32.totalorder 2, %s18
      // Predicated region
      $region61: #{raw_global_pointer.1} parent=5 // pred_check
        %p663 = pneg %p662
      $region62: #{raw_global_pointer.1} parent=5 // pred_check_branch
        %665 = sbr.rel (%p663) target = $region64
      $region63: #{raw_global_pointer.1} parent=5 // pred_region
        %s666 = ssub.s32 %s18, 2
        // Predicated region
        $region65: #{raw_global_pointer.1} parent=63 // pred_check
          %p667 = pneg %p251
        $region66: #{raw_global_pointer.1} parent=63 // pred_check_branch
          %669 = sbr.rel (%p667) target = $region68
        $region67: #{raw_global_pointer.1} parent=63 // pred_region
          %s670 = sand.u32 %s236, 1
          %s671 = scalar_lea.sflag [#allocation3], %s670
          %s672 = sand.u32 %s236, 1
          %s673 = smul.addr %s672, 24
          %s674 = scalar_lea.vmem [#allocation2], %s673
          %675 = dma.done %s671, 384
        $region68: #{raw_global_pointer.1} parent=63 // pred_fallthru
          _
      $region64: #{raw_global_pointer.1} parent=5 // pred_fallthru
        _
    $region6: #{raw_global_pointer.1} parent=1 // loop_footer
      %s22 = sadd.s32 1, %s18
    $region7: #{raw_global_pointer.1} parent=1 // loop_footer_branch
      %17 = sbr.rel target = $region3
    $region8: #{raw_global_pointer.1} parent=1 // loop_exit
      _
    %676 = vsyncpa [#allocation3], 1
    %s677 = scalar_lea.sflag [#allocation3], 1
    %678 = vsyncpa %s677, 1

</llo_original>
